<compile_context>
chip_gen: v6e
topology: v6e:2x2x1
jax: 0.10.0
libtpu: 0.0.40
codegen_flags: <defaults>
</compile_context>

<pallas_src>
import functools

import jax
import jax.numpy as jnp
import numpy as np
from jax import lax
from jax.experimental import pallas as pl
from jax.experimental.pallas import tpu as pltpu


# ----------------------------------------------------------------------------
# Pallas kernel
# ----------------------------------------------------------------------------
def upblock_kernel(x_ref, wf_ref, bias_ref, masks_ref, up_ref, out_ref, p_ref,
                   *, s_im1, s_ip1, s_imw, s_ipw):
    """Fused conv3x3(reflect) + BN(eval) + LeakyReLU(0.1) + 2x bilinear up.

      x_ref    : (1, Cp, H*W)      input, channels zero-padded to Cp (mult of 8)
      wf_ref   : (Cout, 9*Cp)      conv weights * BN scale, tap-major (ky,kx,ci)
      bias_ref : (Cout, 1)         folded conv-bias + BN shift
      masks_ref: (4, H*W)          {w==0, w==W-1, h==0, h==H-1} as 0/1 floats
      up_ref   : (H*W, 4*H*W)      kron(uh, uw)^T fused 2x bilinear matrix
      out_ref  : (1, Cout, 4*H*W)  lane-dense collapsed output slab
      p_ref    : (9*Cp, H*W)       VMEM scratch: im2col matrix
      s_*      : static roll shifts that bring the value at flat index
                 i-1 / i+1 / i-W / i+W to position i.
    """
    x = x_ref[0]                         # (Cp, HW), spatial on the lane axis
    cp = x.shape[0]

    m = masks_ref[...]                   # (4, HW) 0/1 floats
    m_w0, m_wl = m[0:1, :], m[1:2, :]
    m_h0, m_hl = m[2:3, :], m[3:4, :]

    def blend(mask, a, b):               # mask ? a : b  (pure VPU FMAs)
        return mask * a + (1.0 - mask) * b

    # --- 3x3 reflect-padded neighbourhood via lane rolls (XLU slot) --------
    left = pltpu.roll(x, s_im1, axis=1)      # value from column w-1
    right = pltpu.roll(x, s_ip1, axis=1)     # value from column w+1
    x_dx = [blend(m_w0, right, left),        # dx = -1 (reflect at w == 0)
            x,                               # dx =  0
            blend(m_wl, left, right)]        # dx = +1 (reflect at w == W-1)

    for j, xj in enumerate(x_dx):
        above = pltpu.roll(xj, s_imw, axis=1)    # value from row h-1
        below = pltpu.roll(xj, s_ipw, axis=1)    # value from row h+1
        taps = [blend(m_h0, below, above),       # dy = -1 (reflect at h == 0)
                xj,                              # dy =  0
                blend(m_hl, above, below)]       # dy = +1 (reflect at h == H-1)
        for i, tap in enumerate(taps):
            k = i * 3 + j                        # tap index, ky-major (ky, kx)
            p_ref[k * cp:(k + 1) * cp, :] = tap  # aligned 8-row slab store

    # --- conv (+ folded BN scale) as ONE MXU matmul; bias; LeakyReLU(0.1) --
    y = jnp.dot(wf_ref[...], p_ref[...], preferred_element_type=jnp.float32)
    y = y + bias_ref[...]
    y = jnp.where(y >= 0.0, y, 0.1 * y)          # (Cout, HW)

    # --- fused 2x bilinear upsample (both axes) as one matmul --------------
    # out[c, Ho*2W + Wo] = sum_{h,w} y[c, h*W + w] * uh[Ho, h] * uw[Wo, w]
    u = jnp.dot(y, up_ref[...], preferred_element_type=jnp.float32)
    out_ref[0] = u.astype(out_ref.dtype)         # (Cout, 4*HW) lane-dense store


# ----------------------------------------------------------------------------
# tiny probe: pin down pltpu.roll's sign convention at runtime (one-off)
# ----------------------------------------------------------------------------
def _roll_probe_kernel(x_ref, o_ref):
    o_ref[...] = pltpu.roll(x_ref[...], 1, axis=1)


@functools.lru_cache(maxsize=None)
def _roll_matches_numpy() -> bool:
    """True iff pltpu.roll(x, s, axis)[i] == x[(i - s) % n] (np.roll convention)."""
    x = jnp.broadcast_to(jnp.arange(128, dtype=jnp.float32), (8, 128))
    out = pl.pallas_call(
        _roll_probe_kernel,
        out_shape=jax.ShapeDtypeStruct((8, 128), jnp.float32),
    )(x)
    return bool(jax.device_get(out)[0, 1] == 0.0)


# ----------------------------------------------------------------------------
# wrapper
# ----------------------------------------------------------------------------
def _upsample_matrix(n_in: int) -> np.ndarray:
    """2x bilinear (align_corners=False) interpolation matrix, PyTorch exact."""
    n_out = 2 * n_in
    dst = np.arange(n_out, dtype=np.float64)
    src = np.maximum((dst + 0.5) / 2.0 - 0.5, 0.0)
    i0 = np.floor(src).astype(np.int64)
    frac = src - i0
    i1 = np.minimum(i0 + 1, n_in - 1)
    u = np.zeros((n_out, n_in), dtype=np.float32)
    u[np.arange(n_out), i0] += (1.0 - frac).astype(np.float32)
    u[np.arange(n_out), i1] += frac.astype(np.float32)
    return u


def upblock_x1_forward(x_nchw, w_hwio, conv_b, gamma, beta, r_mean, r_var,
                       eps=1e-5):
    N, Cin, H, W = x_nchw.shape
    Cout = w_hwio.shape[-1]
    HW = H * W
    Cp = ((Cin + 7) // 8) * 8            # channels padded to a sublane multiple

    # Fold conv bias + BatchNorm(eval) into per-channel scale/shift and fold
    # the scale straight into the conv weights (saves a VPU pass in-kernel).
    scale = (gamma / jnp.sqrt(r_var + eps)).astype(jnp.float32)          # (Cout,)
    bias = ((conv_b - r_mean) * scale + beta).astype(jnp.float32)        # (Cout,)
    w_pad = jnp.pad(w_hwio.astype(jnp.float32),
                    ((0, 0), (0, 0), (0, Cp - Cin), (0, 0)))             # (3,3,Cp,Cout)
    wf = jnp.transpose(w_pad.reshape(9 * Cp, Cout)) * scale[:, None]     # (Cout, 9*Cp)
    bias2 = bias.reshape(Cout, 1)

    # Input stays NCHW; only a free reshape + tiny zero channel pad (no NHWC
    # transpose and no reflect-pad HBM round trip -- both happen in-kernel).
    x = x_nchw.astype(jnp.float32).reshape(N, Cin, HW)
    x = jnp.pad(x, ((0, 0), (0, Cp - Cin), (0, 0)))

    # Host-precomputed constants.
    idx = np.arange(HW)
    masks = np.stack([(idx % W) == 0,
                      (idx % W) == W - 1,
                      (idx // W) == 0,
                      (idx // W) == H - 1]).astype(np.float32)           # (4, HW)
    uh = _upsample_matrix(H)                                             # (2H, H)
    uw = _upsample_matrix(W)                                             # (2W, W)
    # Fused 2D upsample matrix; O((H*W)*(4*H*W)) so fine at these sizes.
    # TODO(synk): switch to separable per-axis matmuls / roll+FMA for large H*W.
    up = np.ascontiguousarray(np.kron(uh, uw).T).astype(np.float32)      # (HW, 4HW)

    # Static roll shifts (sign convention resolved once by a tiny probe).
    if _roll_matches_numpy():
        shift_from = lambda d: d % HW          # value at i-d lands at i
    else:
        shift_from = lambda d: (-d) % HW
    kernel = functools.partial(
        upblock_kernel,
        s_im1=shift_from(1), s_ip1=shift_from(-1),
        s_imw=shift_from(W), s_ipw=shift_from(-W))

    out_flat = pl.pallas_call(
        kernel,
        out_shape=jax.ShapeDtypeStruct((N, Cout, 4 * HW), jnp.float32),
        grid_spec=pltpu.PrefetchScalarGridSpec(
            num_scalar_prefetch=0,
            grid=(N,),   # one image per TC on v7x; ~free on single-TC v5e/v6e
            in_specs=[
                pl.BlockSpec((1, Cp, HW), lambda n: (n, 0, 0)),
                pl.BlockSpec((Cout, 9 * Cp), lambda n: (0, 0)),
                pl.BlockSpec((Cout, 1), lambda n: (0, 0)),
                pl.BlockSpec((4, HW), lambda n: (0, 0)),
                pl.BlockSpec((HW, 4 * HW), lambda n: (0, 0)),
            ],
            out_specs=pl.BlockSpec((1, Cout, 4 * HW), lambda n: (n, 0, 0)),
            scratch_shapes=[pltpu.VMEM((9 * Cp, HW), jnp.float32)],
        ),
        compiler_params=pltpu.CompilerParams(
            dimension_semantics=("parallel",)),
    )(x, wf, bias2, jnp.asarray(masks), jnp.asarray(up))

    # Free metadata reshape back to the PyTorch NCHW convention.
    return out_flat.reshape(N, Cout, 2 * H, 2 * W)


# ----------------------------------------------------------------------------
# pure-JAX reference
# ----------------------------------------------------------------------------
def reference(x_nchw, w_hwio, conv_b, gamma, beta, r_mean, r_var, eps=1e-5):
    x = jnp.transpose(x_nchw, (0, 2, 3, 1)).astype(jnp.float32)
    xp = jnp.pad(x, ((0, 0), (1, 1), (1, 1), (0, 0)), mode='reflect')
    y = lax.conv_general_dilated(
        xp, w_hwio.astype(jnp.float32), window_strides=(1, 1), padding='VALID',
        dimension_numbers=('NHWC', 'HWIO', 'NHWC'),
        precision=lax.Precision.HIGHEST)
    scale = gamma / jnp.sqrt(r_var + eps)
    bias = (conv_b - r_mean) * scale + beta
    y = y * scale + bias
    y = jnp.where(y >= 0, y, 0.1 * y)
    H, W = x.shape[1], x.shape[2]
    uh = jnp.asarray(_upsample_matrix(H))
    uw = jnp.asarray(_upsample_matrix(W))
    t = jnp.einsum('Hh,nhwc->nHwc', uh, y, precision=lax.Precision.HIGHEST)
    u = jnp.einsum('Ww,nHwc->nHWc', uw, t, precision=lax.Precision.HIGHEST)
    return jnp.transpose(u, (0, 3, 1, 2))


# ----------------------------------------------------------------------------
# main
# ----------------------------------------------------------------------------
if __name__ == "__main__":
    key = jax.random.PRNGKey(0)
    k_x, k_w, k_b, k_g, k_be, k_m, k_v = jax.random.split(key, 7)

    N, Cin, Cout, H, W = 2, 4, 8, 16, 16

    x = jax.random.normal(k_x, (N, Cin, H, W), dtype=jnp.float32)
    # Conv weights stored directly in HWIO (equivalent to torch OIHW transposed).
    w_hwio = jax.random.normal(k_w, (3, 3, Cin, Cout), dtype=jnp.float32) * 0.1
    conv_b = jax.random.normal(k_b, (Cout,), dtype=jnp.float32) * 0.1
    gamma = 1.0 + 0.1 * jax.random.normal(k_g, (Cout,), dtype=jnp.float32)
    beta = 0.1 * jax.random.normal(k_be, (Cout,), dtype=jnp.float32)
    r_mean = 0.1 * jax.random.normal(k_m, (Cout,), dtype=jnp.float32)
    r_var = jnp.abs(jax.random.normal(k_v, (Cout,), dtype=jnp.float32)) + 0.5

    out = upblock_x1_forward(x, w_hwio, conv_b, gamma, beta, r_mean, r_var)
    out = jax.block_until_ready(out)

    ref = reference(x, w_hwio, conv_b, gamma, beta, r_mean, r_var)
    ref = jax.block_until_ready(ref)

    assert out.shape == (N, Cout, 2 * H, 2 * W), out.shape
    err = float(jnp.max(jnp.abs(out - ref)))
    assert jnp.allclose(out, ref, atol=2e-4, rtol=2e-4), err
    print("KERNEL_OK")
</pallas_src>

<mosaic_0001>
module attributes {stable_mosaic.version = 11 : i64} {
  func.func @_roll_probe_kernel(%arg0: memref<8x128xf32, #tpu.memory_space<vmem>>, %arg1: memref<8x128xf32, #tpu.memory_space<vmem>>) attributes {dimension_semantics = [], scalar_prefetch = 0 : i64, scratch_operands = 0 : i64, tpu.core_type = #tpu.core_type<tc>} {
    %c0 = arith.constant 0 : index
    %c0_0 = arith.constant 0 : index
    %0 = vector.load %arg0[%c0, %c0_0] : memref<8x128xf32, #tpu.memory_space<vmem>>, vector<8x128xf32>
    %c1_i32 = arith.constant 1 : i32
    %1 = tpu.dynamic_rotate %0 by %c1_i32 dim 1 : vector<8x128xf32>, i32 -> vector<8x128xf32>
    %c0_1 = arith.constant 0 : index
    %c0_2 = arith.constant 0 : index
    %2 = vector.load %arg1[%c0_1, %c0_2] : memref<8x128xf32, #tpu.memory_space<vmem>>, vector<8x128xf32>
    tpu.vector_store %arg1[%c0_1, %c0_2], %1 {strides = array<i32>} : memref<8x128xf32, #tpu.memory_space<vmem>>, vector<8x128xf32>,
    return
  }
}

</mosaic_0001>

<llo_original>
// kernel: tpu_custom_call.1
$region0: #{tpu_custom_call.1}
  #allocation0 [shape = 'u32[]', space=smem, size = 0x4, offset = 0x4, fixed_abs, tag = 'smem constant byte address 0x4 - core index']
  #allocation1 [shape = 'u32[144,128]{1,0:T(1,128)}', space=vmem, size = 0x12000, scoped, tag = 'internal scratch']
  %s0 = inlined_call_operand.hbm [shape: f32[8,128], index: 0, kind: input, shape index: {}]
  %s1 = inlined_call_operand.hbm [shape: f32[8,128], index: 1, kind: output, shape index: {}]
  %s2 = sld [smem:[#allocation0]]
  $region18: #{tpu_custom_call.1} parent=0
    _
  %s4 = ssub.s32 1, %s2
  %s5 = scalar_select 0, %s4, %s2
  $region1: #{tpu_custom_call.1} parent=0
    #allocation2 [shape = 'u8[4096]{0}', space=vmem, size = 0x1000, scoped, tag = 'input window, operand 0, single buffered']
    #allocation3 [shape = 's32[1]{0}', space=sflag, size = 0x4, scoped, tag = 'scoped memory for tpu_custom_call.1']
    #allocation4 [shape = 's32[1]{0}', space=sflag, size = 0x4, scoped, tag = 'scoped memory for tpu_custom_call.1']
    #allocation5 [shape = 'u8[4096]{0}', space=vmem, size = 0x1000, scoped, tag = 'output window, operand 0, single buffered']
    %6 = vsyncpa [#allocation3], 0
    %7 = vsyncpa [#allocation4], 0
    // Predicated region
    $region2: #{tpu_custom_call.1} parent=1 // pred_check
      _
    $region3: #{tpu_custom_call.1} parent=1 // pred_check_branch
      %9 = sbr.rel (0) target = $region5
    $region4: #{tpu_custom_call.1} parent=1 // pred_region
      %s11 = ssub.s32 128, 128
      %12 = vsyncadd [#allocation3], %s11
      %s14 = sshll.u32 [#allocation2], 4
      %s15 = int_to_ptr.vmem [resolvable:$true] %s14
      %17 = dma.hbm_to_vmem [thread:$0]  %s0, 128, %s15, [#allocation3]
    $region5: #{tpu_custom_call.1} parent=1 // pred_fallthru
      _
    // Predicated region
    $region6: #{tpu_custom_call.1} parent=1 // pred_check
      _
    $region7: #{tpu_custom_call.1} parent=1 // pred_check_branch
      %19 = sbr.rel (0) target = $region9
    $region8: #{tpu_custom_call.1} parent=1 // pred_region
      %20 = dma.done [#allocation3], 128
    $region9: #{tpu_custom_call.1} parent=1 // pred_fallthru
      _
    %v21 = vld [vmem:[#allocation2] sm:$0xff]
    %22 = vrot.lane.b32.xlu0 %v21, 1
    %v23 = vpop.permute.xlu0 %22
    %24 = vst [vmem:[#allocation5] sm:$0xff] %v23
    // Predicated region
    $region10: #{tpu_custom_call.1} parent=1 // pred_check
      _
    $region11: #{tpu_custom_call.1} parent=1 // pred_check_branch
      %26 = sbr.rel (0) target = $region13
    $region12: #{tpu_custom_call.1} parent=1 // pred_region
      %s28 = ssub.s32 128, 128
      %29 = vsyncadd [#allocation4], %s28
      %s31 = sshll.u32 [#allocation5], 4
      %s32 = int_to_ptr.vmem [resolvable:$true] %s31
      %34 = dma.vmem_to_hbm [thread:$0]  %s32, 128, %s1, [#allocation4]
    $region13: #{tpu_custom_call.1} parent=1 // pred_fallthru
      _
    // Predicated region
    $region14: #{tpu_custom_call.1} parent=1 // pred_check
      _
    $region15: #{tpu_custom_call.1} parent=1 // pred_check_branch
      %36 = sbr.rel (0) target = $region17
    $region16: #{tpu_custom_call.1} parent=1 // pred_region
      %37 = dma.done [#allocation4], 128
    $region17: #{tpu_custom_call.1} parent=1 // pred_fallthru
      _
    %38 = vsyncpa [#allocation3], 1
    %39 = vsyncpa [#allocation4], 1

</llo_original>
